<compile_context>
chip_gen: v5e
topology: v5e:2x2
jax: 0.10.0
libtpu: 0.0.40
codegen_flags: <defaults>
</compile_context>

<pallas_src>
import math

import jax
import jax.numpy as jnp
from jax.experimental import pallas as pl
from jax.experimental.pallas import tpu as pltpu

H1, H2 = 64, 32  # hidden sizes from get_nn()


def _sigmoid(x):
    # sigmoid(x) == 0.5*(tanh(x/2)+1): single EUP transcendental; the 0.5*/+1
    # ride in spare VALU slots.
    return 0.5 * (jnp.tanh(0.5 * x) + 1.0)


def _envnet_kernel(obv_ref, act_ref,
                   w1o_ref, w1a_ref, b1_ref,
                   w2_ref, b2_ref,
                   w3_ref, b3_ref,
                   o_ref):
    """Fused 3-head MLP (Linear->Sigmoid->Linear->Sigmoid->Linear) on one
    (TB, *) batch tile.  Concat is a split first-layer matmul; layers 2/3 use
    block-diagonal packed weights, so all three heads share 3 matmuls and one
    output store.  Matmul operands use the packed-weight dtype (bf16 by
    default) with f32 accumulation; bias-add/sigmoid stay f32."""
    mm = w2_ref.dtype
    h1 = jnp.dot(obv_ref[...].astype(mm), w1o_ref[...],
                 preferred_element_type=jnp.float32)
    h1 = h1 + jnp.dot(act_ref[...].astype(mm), w1a_ref[...],
                      preferred_element_type=jnp.float32)
    h1 = _sigmoid(h1 + b1_ref[...])                              # (TB, 3*H1) f32
    h2 = _sigmoid(
        jnp.dot(h1.astype(mm), w2_ref[...],
                preferred_element_type=jnp.float32) + b2_ref[...])  # (TB, 3*H2)
    out = (jnp.dot(h2.astype(mm), w3_ref[...],
                   preferred_element_type=jnp.float32)
           + b3_ref[...])                                        # (TB, obv_dim+2)
    o_ref[...] = out.astype(o_ref.dtype)


def init_mlp3(key, d_in, d_out):
    """Deterministic init matching get_nn(d_in, d_out) layer shapes.
    Weights are (in, out) = transpose of PyTorch's nn.Linear weight."""
    ks = jax.random.split(key, 6)
    dims = [(d_in, H1), (H1, H2), (H2, d_out)]
    params = []
    for i, (di, do) in enumerate(dims):
        bound = 1.0 / math.sqrt(di)   # PyTorch default U(-1/sqrt(in), 1/sqrt(in))
        w = jax.random.uniform(ks[2 * i], (di, do), jnp.float32, -bound, bound)
        b = jax.random.uniform(ks[2 * i + 1], (1, do), jnp.float32, -bound, bound)
        params += [w, b]
    return tuple(params)


def init_envnet(key, obv_dim, act_dim):
    k_s, k_r, k_d = jax.random.split(key, 3)
    d_in = obv_dim + act_dim
    return {
        "state_net": init_mlp3(k_s, d_in, obv_dim),
        "reward_net": init_mlp3(k_r, d_in, 1),
        "done_net": init_mlp3(k_d, d_in, 1),
    }


def pack_envnet_params(heads, obv_dim, act_dim, matmul_dtype=jnp.bfloat16):
    """Pack the three heads for the fused kernel.

    W1 -> (d_in, 3*H1) concatenated along the output axis, then split by row
    into (obv_dim, 3*H1) and (act_dim, 3*H1) so the concat happens implicitly.
    W2 -> block-diagonal (3*H1, 3*H2); W3 -> block-diagonal (3*H2, obv_dim+2)
    with per-head output columns [state | reward | done].  Weights are cast to
    `matmul_dtype` (bf16 by default) for the MXU; biases stay f32."""
    order = ["state_net", "reward_net", "done_net"]
    out_dims = {"state_net": obv_dim, "reward_net": 1, "done_net": 1}
    d_out_total = obv_dim + 2

    w1 = jnp.concatenate([heads[h][0] for h in order], axis=1)   # (d_in, 3*H1)
    b1 = jnp.concatenate([heads[h][1] for h in order], axis=1)   # (1, 3*H1)
    w1_obv, w1_act = w1[:obv_dim], w1[obv_dim:]

    w2 = jnp.zeros((3 * H1, 3 * H2), jnp.float32)
    w3 = jnp.zeros((3 * H2, d_out_total), jnp.float32)
    col = 0
    for i, h in enumerate(order):
        w2 = w2.at[i * H1:(i + 1) * H1, i * H2:(i + 1) * H2].set(heads[h][2])
        do = out_dims[h]
        w3 = w3.at[i * H2:(i + 1) * H2, col:col + do].set(heads[h][4])
        col += do
    b2 = jnp.concatenate([heads[h][3] for h in order], axis=1)   # (1, 3*H2)
    b3 = jnp.concatenate([heads[h][5] for h in order], axis=1)   # (1, obv_dim+2)

    return {"w1_obv": w1_obv.astype(matmul_dtype),
            "w1_act": w1_act.astype(matmul_dtype),
            "b1": b1.astype(jnp.float32),
            "w2": w2.astype(matmul_dtype), "b2": b2.astype(jnp.float32),
            "w3": w3.astype(matmul_dtype), "b3": b3.astype(jnp.float32),
            "obv_dim": obv_dim, "act_dim": act_dim}


def _batch_semantics():
    """Semantics for the batch grid axis: CORE_PARALLEL on v7x (2 TCs/chip) so
    both TensorCores get batch tiles; plain 'parallel' on v5e/v6e."""
    try:
        kind = jax.devices()[0].device_kind.lower()
    except Exception:
        kind = ""
    if "v7" in kind:
        return (pltpu.CORE_PARALLEL,), True
    return ("parallel",), False


def envnet_forward(packed, obv, act, *, tb=4096):
    """Fused EnvNet forward: single pallas_call for all three heads.
    Returns (next_state, reward, done) matching the PyTorch module."""
    obv = obv.astype(jnp.float32)
    act = act.astype(jnp.float32)          # torch: act.float()
    B = obv.shape[0]
    obv_dim = packed["obv_dim"]
    act_dim = packed["act_dim"]
    d_in = obv_dim + act_dim
    d_out = obv_dim + 2

    semantics, core_parallel = _batch_semantics()

    # Batch tiling: one full block for small B; otherwise tile by tb (multiple
    # of 8 sublanes).  No wrapper-side pad: the ragged final block is handled
    # by Pallas OOB-write masking (rows are independent, so garbage OOB input
    # rows are never observable).
    TB = B if B <= tb else tb
    if core_parallel and B >= 16:
        half = -(-B // 2)                   # ceil(B/2)
        TB = min(TB, -(-half // 8) * 8)     # nb >= 2 so both v7x TCs get work
    nb = pl.cdiv(B, TB)

    act_spec = lambda d: pl.BlockSpec((TB, d), lambda i: (i, 0))
    wspec = lambda a: pl.BlockSpec(a.shape, lambda i, _nd=a.ndim: (0,) * _nd)

    weight_keys = ("w1_obv", "w1_act", "b1", "w2", "b2", "w3", "b3")
    weight_bytes = sum(int(packed[k].size) * packed[k].dtype.itemsize
                       for k in weight_keys)
    cost = pl.CostEstimate(
        flops=2 * B * (d_in * 3 * H1 + (3 * H1) * (3 * H2) + (3 * H2) * d_out),
        transcendentals=B * (3 * H1 + 3 * H2),
        bytes_accessed=B * (d_in * 4 + d_out * 4) + weight_bytes,
    )

    out = pl.pallas_call(
        _envnet_kernel,
        out_shape=jax.ShapeDtypeStruct((B, d_out), jnp.float32),
        grid=(nb,),
        in_specs=[
            act_spec(obv_dim), act_spec(act_dim),
            wspec(packed["w1_obv"]), wspec(packed["w1_act"]), wspec(packed["b1"]),
            wspec(packed["w2"]), wspec(packed["b2"]),
            wspec(packed["w3"]), wspec(packed["b3"]),
        ],
        out_specs=pl.BlockSpec((TB, d_out), lambda i: (i, 0)),
        compiler_params=pltpu.CompilerParams(
            dimension_semantics=semantics,
            vmem_limit_bytes=32 * 1024 * 1024),
        cost_estimate=cost,
    )(obv, act, packed["w1_obv"], packed["w1_act"], packed["b1"],
      packed["w2"], packed["b2"], packed["w3"], packed["b3"])

    next_state = out[:, :obv_dim]
    reward = out[:, obv_dim:obv_dim + 1]
    done = out[:, obv_dim + 1:obv_dim + 2]
    return next_state, reward, done


def _ref_mlp3(x, params):
    w1, b1, w2, b2, w3, b3 = params
    h1 = jax.nn.sigmoid(x @ w1 + b1)
    h2 = jax.nn.sigmoid(h1 @ w2 + b2)
    return h2 @ w3 + b3


if __name__ == "__main__":
    key = jax.random.PRNGKey(0)
    k_p, k_obv, k_act = jax.random.split(key, 3)

    batch, obv_dim, act_dim = 2, 16, 8
    heads = init_envnet(k_p, obv_dim, act_dim)

    obv = jax.random.normal(k_obv, (batch, obv_dim), jnp.float32)
    act = jax.random.normal(k_act, (batch, act_dim), jnp.float32)
    x = jnp.concatenate([obv, act], axis=1)

    # 1) Exact f32-MXU path (small B, single block): tight reference check.
    packed_f32 = pack_envnet_params(heads, obv_dim, act_dim,
                                    matmul_dtype=jnp.float32)
    next_state, reward, done = jax.block_until_ready(
        envnet_forward(packed_f32, obv, act))
    assert next_state.shape == (batch, obv_dim)
    assert reward.shape == (batch, 1)
    assert done.shape == (batch, 1)
    assert jnp.allclose(next_state, _ref_mlp3(x, heads["state_net"]), atol=1e-4)
    assert jnp.allclose(reward, _ref_mlp3(x, heads["reward_net"]), atol=1e-4)
    assert jnp.allclose(done, _ref_mlp3(x, heads["done_net"]), atol=1e-4)

    # 2) bf16-MXU path, tiled batch with a ragged (masked, unpadded) final
    #    block: B=1000 with tb=256 -> grid=(4,), last block has 232 live rows.
    packed_bf16 = pack_envnet_params(heads, obv_dim, act_dim)  # bf16 default
    k_obv2, k_act2 = jax.random.split(jax.random.PRNGKey(1), 2)
    B2 = 1000
    obv2 = jax.random.normal(k_obv2, (B2, obv_dim), jnp.float32)
    act2 = jax.random.normal(k_act2, (B2, act_dim), jnp.float32)
    ns2, rw2, dn2 = jax.block_until_ready(
        envnet_forward(packed_bf16, obv2, act2, tb=256))
    x2 = jnp.concatenate([obv2, act2], axis=1)
    assert jnp.allclose(ns2, _ref_mlp3(x2, heads["state_net"]),
                        atol=3e-2, rtol=3e-2)
    assert jnp.allclose(rw2, _ref_mlp3(x2, heads["reward_net"]),
                        atol=3e-2, rtol=3e-2)
    assert jnp.allclose(dn2, _ref_mlp3(x2, heads["done_net"]),
                        atol=3e-2, rtol=3e-2)

    print("KERNEL_OK")
</pallas_src>

<mosaic_0001>
module attributes {stable_mosaic.version = 11 : i64} {
  func.func @_envnet_kernel(%arg0: i32, %arg1: memref<2x16xf32, #tpu.memory_space<vmem>>, %arg2: memref<2x8xf32, #tpu.memory_space<vmem>>, %arg3: memref<16x192xf32, #tpu.memory_space<vmem>>, %arg4: memref<8x192xf32, #tpu.memory_space<vmem>>, %arg5: memref<1x192xf32, #tpu.memory_space<vmem>>, %arg6: memref<192x96xf32, #tpu.memory_space<vmem>>, %arg7: memref<1x96xf32, #tpu.memory_space<vmem>>, %arg8: memref<96x18xf32, #tpu.memory_space<vmem>>, %arg9: memref<1x18xf32, #tpu.memory_space<vmem>>, %arg10: memref<2x18xf32, #tpu.memory_space<vmem>>) attributes {dimension_semantics = [#tpu.dimension_semantics<parallel>], iteration_bounds = array<i64: 1>, scalar_prefetch = 0 : i64, scratch_operands = 0 : i64, tpu.core_type = #tpu.core_type<tc>, window_params = [{transform_indices = @transform_0, window_bounds = array<i64: 2, 16>}, {transform_indices = @transform_1, window_bounds = array<i64: 2, 8>}, {pipeline_mode = #tpu.pipeline_mode<synchronous>, transform_indices = @transform_2, window_bounds = array<i64: 16, 192>}, {pipeline_mode = #tpu.pipeline_mode<synchronous>, transform_indices = @transform_3, window_bounds = array<i64: 8, 192>}, {pipeline_mode = #tpu.pipeline_mode<synchronous>, transform_indices = @transform_4, window_bounds = array<i64: 1, 192>}, {pipeline_mode = #tpu.pipeline_mode<synchronous>, transform_indices = @transform_5, window_bounds = array<i64: 192, 96>}, {pipeline_mode = #tpu.pipeline_mode<synchronous>, transform_indices = @transform_6, window_bounds = array<i64: 1, 96>}, {pipeline_mode = #tpu.pipeline_mode<synchronous>, transform_indices = @transform_7, window_bounds = array<i64: 96, 18>}, {pipeline_mode = #tpu.pipeline_mode<synchronous>, transform_indices = @transform_8, window_bounds = array<i64: 1, 18>}, {transform_indices = @transform_9, window_bounds = array<i64: 2, 18>}]} {
    %c0 = arith.constant 0 : index
    %c0_0 = arith.constant 0 : index
    %0 = vector.load %arg1[%c0, %c0_0] : memref<2x16xf32, #tpu.memory_space<vmem>>, vector<2x16xf32>
    %c0_1 = arith.constant 0 : index
    %c0_2 = arith.constant 0 : index
    %1 = vector.load %arg3[%c0_1, %c0_2] : memref<16x192xf32, #tpu.memory_space<vmem>>, vector<16x192xf32>
    %cst = arith.constant dense<0.000000e+00> : vector<2x192xf32>
    %2 = tpu.matmul %0, %1, %cst {dimension_numbers = #tpu.dot_dimension_numbers<[1], [0], [0], [1], [0, 0, 1, 1], [], []>} : vector<2x16xf32>, vector<16x192xf32>, vector<2x192xf32> -> vector<2x192xf32>
    %c0_3 = arith.constant 0 : index
    %c0_4 = arith.constant 0 : index
    %3 = vector.load %arg2[%c0_3, %c0_4] : memref<2x8xf32, #tpu.memory_space<vmem>>, vector<2x8xf32>
    %c0_5 = arith.constant 0 : index
    %c0_6 = arith.constant 0 : index
    %4 = vector.load %arg4[%c0_5, %c0_6] : memref<8x192xf32, #tpu.memory_space<vmem>>, vector<8x192xf32>
    %cst_7 = arith.constant dense<0.000000e+00> : vector<2x192xf32>
    %5 = tpu.matmul %3, %4, %cst_7 {dimension_numbers = #tpu.dot_dimension_numbers<[1], [0], [0], [1], [0, 0, 1, 1], [], []>} : vector<2x8xf32>, vector<8x192xf32>, vector<2x192xf32> -> vector<2x192xf32>
    %6 = arith.addf %2, %5 : vector<2x192xf32>
    %c0_8 = arith.constant 0 : index
    %c0_9 = arith.constant 0 : index
    %7 = vector.load %arg5[%c0_8, %c0_9] : memref<1x192xf32, #tpu.memory_space<vmem>>, vector<1x192xf32>
    %8 = vector.broadcast %7 : vector<1x192xf32> to vector<2x192xf32>
    %9 = arith.addf %6, %8 : vector<2x192xf32>
    %cst_10 = arith.constant 5.000000e-01 : f32
    %10 = vector.broadcast %cst_10 : f32 to vector<2x192xf32>
    %11 = arith.mulf %10, %9 : vector<2x192xf32>
    %12 = math.tanh %11 : vector<2x192xf32>
    %cst_11 = arith.constant 1.000000e+00 : f32
    %13 = vector.broadcast %cst_11 : f32 to vector<2x192xf32>
    %14 = arith.addf %12, %13 : vector<2x192xf32>
    %cst_12 = arith.constant 5.000000e-01 : f32
    %15 = vector.broadcast %cst_12 : f32 to vector<2x192xf32>
    %16 = arith.mulf %15, %14 : vector<2x192xf32>
    %c0_13 = arith.constant 0 : index
    %c0_14 = arith.constant 0 : index
    %17 = vector.load %arg6[%c0_13, %c0_14] : memref<192x96xf32, #tpu.memory_space<vmem>>, vector<192x96xf32>
    %cst_15 = arith.constant dense<0.000000e+00> : vector<2x96xf32>
    %18 = tpu.matmul %16, %17, %cst_15 {dimension_numbers = #tpu.dot_dimension_numbers<[1], [0], [0], [1], [0, 0, 1, 1], [], []>} : vector<2x192xf32>, vector<192x96xf32>, vector<2x96xf32> -> vector<2x96xf32>
    %c0_16 = arith.constant 0 : index
    %c0_17 = arith.constant 0 : index
    %19 = vector.load %arg7[%c0_16, %c0_17] : memref<1x96xf32, #tpu.memory_space<vmem>>, vector<1x96xf32>
    %20 = vector.broadcast %19 : vector<1x96xf32> to vector<2x96xf32>
    %21 = arith.addf %18, %20 : vector<2x96xf32>
    %cst_18 = arith.constant 5.000000e-01 : f32
    %22 = vector.broadcast %cst_18 : f32 to vector<2x96xf32>
    %23 = arith.mulf %22, %21 : vector<2x96xf32>
    %24 = math.tanh %23 : vector<2x96xf32>
    %cst_19 = arith.constant 1.000000e+00 : f32
    %25 = vector.broadcast %cst_19 : f32 to vector<2x96xf32>
    %26 = arith.addf %24, %25 : vector<2x96xf32>
    %cst_20 = arith.constant 5.000000e-01 : f32
    %27 = vector.broadcast %cst_20 : f32 to vector<2x96xf32>
    %28 = arith.mulf %27, %26 : vector<2x96xf32>
    %c0_21 = arith.constant 0 : index
    %c0_22 = arith.constant 0 : index
    %29 = vector.load %arg8[%c0_21, %c0_22] : memref<96x18xf32, #tpu.memory_space<vmem>>, vector<96x18xf32>
    %cst_23 = arith.constant dense<0.000000e+00> : vector<2x18xf32>
    %30 = tpu.matmul %28, %29, %cst_23 {dimension_numbers = #tpu.dot_dimension_numbers<[1], [0], [0], [1], [0, 0, 1, 1], [], []>} : vector<2x96xf32>, vector<96x18xf32>, vector<2x18xf32> -> vector<2x18xf32>
    %c0_24 = arith.constant 0 : index
    %c0_25 = arith.constant 0 : index
    %31 = vector.load %arg9[%c0_24, %c0_25] : memref<1x18xf32, #tpu.memory_space<vmem>>, vector<1x18xf32>
    %32 = vector.broadcast %31 : vector<1x18xf32> to vector<2x18xf32>
    %33 = arith.addf %30, %32 : vector<2x18xf32>
    %c0_26 = arith.constant 0 : index
    %c0_27 = arith.constant 0 : index
    %34 = vector.load %arg10[%c0_26, %c0_27] : memref<2x18xf32, #tpu.memory_space<vmem>>, vector<2x18xf32>
    tpu.vector_store %arg10[%c0_26, %c0_27], %33 {strides = array<i32>} : memref<2x18xf32, #tpu.memory_space<vmem>>, vector<2x18xf32>,
    return
  }
  func.func @transform_0(%arg0: i32) -> (i32, i32) {
    %c0_i32 = arith.constant 0 : i32
    %c0_i32_0 = arith.constant 0 : i32
    return %arg0, %c0_i32 : i32, i32
  }
  func.func @transform_1(%arg0: i32) -> (i32, i32) {
    %c0_i32 = arith.constant 0 : i32
    %c0_i32_0 = arith.constant 0 : i32
    return %arg0, %c0_i32 : i32, i32
  }
  func.func @transform_2(%arg0: i32) -> (i32, i32) {
    %c0_i32 = arith.constant 0 : i32
    %c0_i32_0 = arith.constant 0 : i32
    %c0_i32_1 = arith.constant 0 : i32
    return %c0_i32, %c0_i32_0 : i32, i32
  }
  func.func @transform_3(%arg0: i32) -> (i32, i32) {
    %c0_i32 = arith.constant 0 : i32
    %c0_i32_0 = arith.constant 0 : i32
    %c0_i32_1 = arith.constant 0 : i32
    return %c0_i32, %c0_i32_0 : i32, i32
  }
  func.func @transform_4(%arg0: i32) -> (i32, i32) {
    %c0_i32 = arith.constant 0 : i32
    %c0_i32_0 = arith.constant 0 : i32
    %c0_i32_1 = arith.constant 0 : i32
    return %c0_i32, %c0_i32_0 : i32, i32
  }
  func.func @transform_5(%arg0: i32) -> (i32, i32) {
    %c0_i32 = arith.constant 0 : i32
    %c0_i32_0 = arith.constant 0 : i32
    %c0_i32_1 = arith.constant 0 : i32
    return %c0_i32, %c0_i32_0 : i32, i32
  }
  func.func @transform_6(%arg0: i32) -> (i32, i32) {
    %c0_i32 = arith.constant 0 : i32
    %c0_i32_0 = arith.constant 0 : i32
    %c0_i32_1 = arith.constant 0 : i32
    return %c0_i32, %c0_i32_0 : i32, i32
  }
  func.func @transform_7(%arg0: i32) -> (i32, i32) {
    %c0_i32 = arith.constant 0 : i32
    %c0_i32_0 = arith.constant 0 : i32
    %c0_i32_1 = arith.constant 0 : i32
    return %c0_i32, %c0_i32_0 : i32, i32
  }
  func.func @transform_8(%arg0: i32) -> (i32, i32) {
    %c0_i32 = arith.constant 0 : i32
    %c0_i32_0 = arith.constant 0 : i32
    %c0_i32_1 = arith.constant 0 : i32
    return %c0_i32, %c0_i32_0 : i32, i32
  }
  func.func @transform_9(%arg0: i32) -> (i32, i32) {
    %c0_i32 = arith.constant 0 : i32
    %c0_i32_0 = arith.constant 0 : i32
    return %arg0, %c0_i32 : i32, i32
  }
}

</mosaic_0001>

<llo_original>
// kernel: tpu_custom_call.1
$region0: #{tpu_custom_call.1}
  #allocation0 [shape = 'u32[]', space=smem, size = 0x4, offset = 0x4, fixed_abs, tag = 'smem constant byte address 0x4 - core index']
  #allocation1 [shape = 'u32[72,128]{1,0:T(1,128)}', space=vmem, size = 0x9000, scoped, tag = 'internal scratch']
  %s0 = inlined_call_operand.vmem [shape: f32[2,16], index: 0, kind: input, shape index: {}]
  %s1 = inlined_call_operand.vmem [shape: f32[2,8], index: 1, kind: input, shape index: {}]
  %s2 = inlined_call_operand.vmem [shape: f32[16,192], index: 2, kind: input, shape index: {}]
  %s3 = inlined_call_operand.vmem [shape: f32[8,192], index: 3, kind: input, shape index: {}]
  %s4 = inlined_call_operand.vmem [shape: f32[1,192], index: 4, kind: input, shape index: {}]
  %s5 = inlined_call_operand.hbm [shape: f32[192,96], index: 5, kind: input, shape index: {}]
  %s6 = inlined_call_operand.vmem [shape: f32[1,96], index: 6, kind: input, shape index: {}]
  %s7 = inlined_call_operand.vmem [shape: f32[96,18], index: 7, kind: input, shape index: {}]
  %s8 = inlined_call_operand.vmem [shape: f32[1,18], index: 8, kind: input, shape index: {}]
  %s9 = inlined_call_operand.hbm [shape: f32[2,18], index: 9, kind: output, shape index: {}]
  %s10 = sld [smem:[#allocation0]]
  $region50: #{tpu_custom_call.1} parent=0
    _
  %s12 = ssub.s32 1, %s10
  %s13 = scalar_select 0, %s12, %s10
  $region1: #{tpu_custom_call.1} parent=0
    #allocation2 [shape = 'u8[98304]{0}', space=vmem, size = 0x18000, scoped, tag = 'input window, operand 5, single buffered']
    #allocation3 [shape = 's32[1]{0}', space=sflag, size = 0x4, scoped, tag = 'scoped memory for tpu_custom_call.1']
    #allocation4 [shape = 's32[1]{0}', space=sflag, size = 0x4, scoped, tag = 'scoped memory for tpu_custom_call.1']
    #allocation5 [shape = 'u8[1024]{0}', space=vmem, size = 0x400, scoped, tag = 'output window, operand 0, single buffered']
    %14 = vsyncpa [#allocation3], 0
    %15 = vsyncpa [#allocation4], 0
    // Predicated region
    $region2: #{tpu_custom_call.1} parent=1 // pred_check
      _
    $region3: #{tpu_custom_call.1} parent=1 // pred_check_branch
      %17 = sbr.rel (0) target = $region5
    $region4: #{tpu_custom_call.1} parent=1 // pred_region
      _
    $region5: #{tpu_custom_call.1} parent=1 // pred_fallthru
      _
    // Predicated region
    $region6: #{tpu_custom_call.1} parent=1 // pred_check
      _
    $region7: #{tpu_custom_call.1} parent=1 // pred_check_branch
      %19 = sbr.rel (0) target = $region9
    $region8: #{tpu_custom_call.1} parent=1 // pred_region
      _
    $region9: #{tpu_custom_call.1} parent=1 // pred_fallthru
      _
    // Predicated region
    $region10: #{tpu_custom_call.1} parent=1 // pred_check
      _
    $region11: #{tpu_custom_call.1} parent=1 // pred_check_branch
      %21 = sbr.rel (0) target = $region13
    $region12: #{tpu_custom_call.1} parent=1 // pred_region
      _
    $region13: #{tpu_custom_call.1} parent=1 // pred_fallthru
      _
    // Predicated region
    $region14: #{tpu_custom_call.1} parent=1 // pred_check
      _
    $region15: #{tpu_custom_call.1} parent=1 // pred_check_branch
      %23 = sbr.rel (0) target = $region17
    $region16: #{tpu_custom_call.1} parent=1 // pred_region
      _
    $region17: #{tpu_custom_call.1} parent=1 // pred_fallthru
      _
    // Predicated region
    $region18: #{tpu_custom_call.1} parent=1 // pred_check
      _
    $region19: #{tpu_custom_call.1} parent=1 // pred_check_branch
      %25 = sbr.rel (0) target = $region21
    $region20: #{tpu_custom_call.1} parent=1 // pred_region
      _
    $region21: #{tpu_custom_call.1} parent=1 // pred_fallthru
      _
    // Predicated region
    $region22: #{tpu_custom_call.1} parent=1 // pred_check
      _
    $region23: #{tpu_custom_call.1} parent=1 // pred_check_branch
      %27 = sbr.rel (0) target = $region25
    $region24: #{tpu_custom_call.1} parent=1 // pred_region
      %29 = vsyncadd [#allocation3], 0
      %s30 = sshll.u32 %s5, 4
      %s31 = int_to_ptr.hbm [resolvable:$true] %s30
      %s32 = sshll.u32 [#allocation2], 4
      %s33 = int_to_ptr.vmem [resolvable:$true] %s32
      %38 = dma.hbm_to_vmem [thread:$0]  %s31, 3072, %s33, [#allocation3], 128, 128, 8
    $region25: #{tpu_custom_call.1} parent=1 // pred_fallthru
      _
    // Predicated region
    $region26: #{tpu_custom_call.1} parent=1 // pred_check
      _
    $region27: #{tpu_custom_call.1} parent=1 // pred_check_branch
      %40 = sbr.rel (0) target = $region29
    $region28: #{tpu_custom_call.1} parent=1 // pred_region
      _
    $region29: #{tpu_custom_call.1} parent=1 // pred_fallthru
      _
    // Predicated region
    $region30: #{tpu_custom_call.1} parent=1 // pred_check
      _
    $region31: #{tpu_custom_call.1} parent=1 // pred_check_branch
      %42 = sbr.rel (0) target = $region33
    $region32: #{tpu_custom_call.1} parent=1 // pred_region
      _
    $region33: #{tpu_custom_call.1} parent=1 // pred_fallthru
      _
    // Predicated region
    $region34: #{tpu_custom_call.1} parent=1 // pred_check
      _
    $region35: #{tpu_custom_call.1} parent=1 // pred_check_branch
      %44 = sbr.rel (0) target = $region37
    $region36: #{tpu_custom_call.1} parent=1 // pred_region
      _
    $region37: #{tpu_custom_call.1} parent=1 // pred_fallthru
      _
    // Predicated region
    $region38: #{tpu_custom_call.1} parent=1 // pred_check
      _
    $region39: #{tpu_custom_call.1} parent=1 // pred_check_branch
      %46 = sbr.rel (0) target = $region41
    $region40: #{tpu_custom_call.1} parent=1 // pred_region
      %48 = dma.done [#allocation3], 3072
    $region41: #{tpu_custom_call.1} parent=1 // pred_fallthru
      _
    %v49 = vld [vmem:[%s0] sm:$0x3]
    %v50 = vld [vmem:[%s2] sm:$0xff]
    %v51 = vld [vmem:[%s2 + $0x8] sm:$0xff]
    %v52 = vld [vmem:[%s2 + $0x10] sm:$0xff]
    %v53 = vld [vmem:[%s2 + $0x18] sm:$0xff]
    %v54 = vld [vmem:[%s1] sm:$0x3]
    %v55 = vld [vmem:[%s3] sm:$0xff]
    %v56 = vld [vmem:[%s3 + $0x8] sm:$0xff]
    %vm57 = vcmask 64512
    %v59 = vsel %vm57, %v54, 0
    %61 = vmatpush.msra.mxu0 0.0
    %62 = vmatpush.msra.mxu0 0.0
    %63 = vmatpush.msra.mxu0 0.0
    %64 = vmatpush.msra.mxu0 0.0
    %65 = vmatpush.msra.mxu0 0.0
    %66 = vmatpush.msra.mxu0 0.0
    %67 = vmatpush.msra.mxu0 0.0
    %68 = vmatpush.msra.mxu0 0.0
    %69 = vmatpush.msra.mxu0 0.0
    %70 = vmatpush.msra.mxu0 0.0
    %71 = vmatpush.msra.mxu0 0.0
    %72 = vmatpush.msra.mxu0 0.0
    %73 = vmatpush.msra.mxu0 0.0
    %74 = vmatpush.msra.mxu0 0.0
    %75 = vmatpush.msra.mxu0 0.0
    %76 = vmatpush.msra.mxu0 %v55
    %77 = vmatmul.f32.gmra.mxu0 %v59
    %v78 = vpop.f32.mrf.mxu0
    %v79 = vadd.f32 0.0, %v78
    %80 = vdwg.mxu0
    %81 = vmatpush.msra.mxu0 0.0
    %82 = vmatpush.msra.mxu0 0.0
    %83 = vmatpush.msra.mxu0 0.0
    %84 = vmatpush.msra.mxu0 0.0
    %85 = vmatpush.msra.mxu0 0.0
    %86 = vmatpush.msra.mxu0 0.0
    %87 = vmatpush.msra.mxu0 0.0
    %88 = vmatpush.msra.mxu0 0.0
    %89 = vmatpush.msra.mxu0 0.0
    %90 = vmatpush.msra.mxu0 0.0
    %91 = vmatpush.msra.mxu0 0.0
    %92 = vmatpush.msra.mxu0 0.0
    %93 = vmatpush.msra.mxu0 0.0
    %94 = vmatpush.msra.mxu0 0.0
    %95 = vmatpush.msra.mxu0 0.0
    %96 = vmatpush.msra.mxu0 %v56
    %97 = vmatmul.f32.gmra.mxu0 %v59
    %v98 = vpop.f32.mrf.mxu0
    %v99 = vadd.f32 0.0, %v98
    %100 = vdwg.mxu0
    %vm101 = vcmask 130048
    %v103 = vsel %vm101, %v49, 0
    %105 = vmatpush.msra.mxu0 0.0
    %106 = vmatpush.msra.mxu0 0.0
    %107 = vmatpush.msra.mxu0 0.0
    %108 = vmatpush.msra.mxu0 0.0
    %109 = vmatpush.msra.mxu0 0.0
    %110 = vmatpush.msra.mxu0 0.0
    %111 = vmatpush.msra.mxu0 0.0
    %112 = vmatpush.msra.mxu0 0.0
    %113 = vmatpush.msra.mxu0 0.0
    %114 = vmatpush.msra.mxu0 0.0
    %115 = vmatpush.msra.mxu0 0.0
    %116 = vmatpush.msra.mxu0 0.0
    %117 = vmatpush.msra.mxu0 0.0
    %118 = vmatpush.msra.mxu0 0.0
    %119 = vmatpush.msra.mxu0 %v52
    %120 = vmatpush.msra.mxu0 %v50
    %121 = vmatmul.f32.gmra.mxu0 %v103
    %v122 = vpop.f32.mrf.mxu0
    %v123 = vadd.f32 %v79, %v122
    %124 = vdwg.mxu0
    %125 = vmatpush.msra.mxu0 0.0
    %126 = vmatpush.msra.mxu0 0.0
    %127 = vmatpush.msra.mxu0 0.0
    %128 = vmatpush.msra.mxu0 0.0
    %129 = vmatpush.msra.mxu0 0.0
    %130 = vmatpush.msra.mxu0 0.0
    %131 = vmatpush.msra.mxu0 0.0
    %132 = vmatpush.msra.mxu0 0.0
    %133 = vmatpush.msra.mxu0 0.0
    %134 = vmatpush.msra.mxu0 0.0
    %135 = vmatpush.msra.mxu0 0.0
    %136 = vmatpush.msra.mxu0 0.0
    %137 = vmatpush.msra.mxu0 0.0
    %138 = vmatpush.msra.mxu0 0.0
    %139 = vmatpush.msra.mxu0 %v53
    %140 = vmatpush.msra.mxu0 %v51
    %141 = vmatmul.f32.gmra.mxu0 %v103
    %v142 = vpop.f32.mrf.mxu0
    %v143 = vadd.f32 %v99, %v142
    %144 = vdwg.mxu0
    %v145 = vld [vmem:[%s4] sm:$0x3]
    %v147 = vperm.slane %v145, 0
    %v148 = vperm.slane %v145, 1
    %v151 = vadd.f32 %v123, %v147
    %v152 = vadd.f32 %v143, %v148
    %v153 = vmul.f32 %v151, 0.5
    %v154 = vmul.f32 %v152, 0.5
    %v155 = vtanh.pop %v153
    %v156 = vtanh.pop %v154
    %v157 = vadd.f32 %v155, 1.0
    %v158 = vadd.f32 %v156, 1.0
    %v159 = vmul.f32 %v157, 0.5
    %v160 = vmul.f32 %v158, 0.5
    %v161 = vld [vmem:[#allocation2] sm:$0xff]
    %v162 = vld [vmem:[#allocation2 + $0x8] sm:$0xff]
    %v163 = vld [vmem:[#allocation2 + $0x10] sm:$0xff]
    %v164 = vld [vmem:[#allocation2 + $0x18] sm:$0xff]
    %v165 = vld [vmem:[#allocation2 + $0x20] sm:$0xff]
    %v166 = vld [vmem:[#allocation2 + $0x28] sm:$0xff]
    %v167 = vld [vmem:[#allocation2 + $0x30] sm:$0xff]
    %v168 = vld [vmem:[#allocation2 + $0x38] sm:$0xff]
    %v169 = vld [vmem:[#allocation2 + $0x40] sm:$0xff]
    %v170 = vld [vmem:[#allocation2 + $0x48] sm:$0xff]
    %v171 = vld [vmem:[#allocation2 + $0x50] sm:$0xff]
    %v172 = vld [vmem:[#allocation2 + $0x58] sm:$0xff]
    %v173 = vld [vmem:[#allocation2 + $0x60] sm:$0xff]
    %v174 = vld [vmem:[#allocation2 + $0x68] sm:$0xff]
    %v175 = vld [vmem:[#allocation2 + $0x70] sm:$0xff]
    %v176 = vld [vmem:[#allocation2 + $0x78] sm:$0xff]
    %v177 = vld [vmem:[#allocation2 + $0x80] sm:$0xff]
    %v178 = vld [vmem:[#allocation2 + $0x88] sm:$0xff]
    %v179 = vld [vmem:[#allocation2 + $0x90] sm:$0xff]
    %v180 = vld [vmem:[#allocation2 + $0x98] sm:$0xff]
    %v181 = vld [vmem:[#allocation2 + $0xa0] sm:$0xff]
    %v182 = vld [vmem:[#allocation2 + $0xa8] sm:$0xff]
    %v183 = vld [vmem:[#allocation2 + $0xb0] sm:$0xff]
    %v184 = vld [vmem:[#allocation2 + $0xb8] sm:$0xff]
    %v185 = vld [vmem:[%s6] sm:$0x1]
    %v187 = vperm.slane %v185, 0
    %vm189 = vcmask 523264
    %v191 = vsel %vm189, %v160, 0
    %193 = vmatpush.msra.mxu0 %v176
    %194 = vmatpush.msra.mxu0 %v175
    %195 = vmatpush.msra.mxu0 %v174
    %196 = vmatpush.msra.mxu0 %v173
    %197 = vmatpush.msra.mxu0 %v172
    %198 = vmatpush.msra.mxu0 %v171
    %199 = vmatpush.msra.mxu0 %v170
    %200 = vmatpush.msra.mxu0 %v169
    %201 = vmatpush.msra.mxu0 %v168
    %202 = vmatpush.msra.mxu0 %v167
    %203 = vmatpush.msra.mxu0 %v166
    %204 = vmatpush.msra.mxu0 %v165
    %205 = vmatpush.msra.mxu0 %v164
    %206 = vmatpush.msra.mxu0 %v163
    %207 = vmatpush.msra.mxu0 %v162
    %208 = vmatpush.msra.mxu0 %v161
    %209 = vmatmul.f32.gmra.mxu0 %v159
    %v210 = vpop.f32.mrf.mxu0
    %v211 = vadd.f32 %v187, %v210
    %212 = vdwg.mxu0
    %213 = vmatpush.msra.mxu0 0.0
    %214 = vmatpush.msra.mxu0 0.0
    %215 = vmatpush.msra.mxu0 0.0
    %216 = vmatpush.msra.mxu0 0.0
    %217 = vmatpush.msra.mxu0 0.0
    %218 = vmatpush.msra.mxu0 0.0
    %219 = vmatpush.msra.mxu0 0.0
    %220 = vmatpush.msra.mxu0 0.0
    %221 = vmatpush.msra.mxu0 %v184
    %222 = vmatpush.msra.mxu0 %v183
    %223 = vmatpush.msra.mxu0 %v182
    %224 = vmatpush.msra.mxu0 %v181
    %225 = vmatpush.msra.mxu0 %v180
    %226 = vmatpush.msra.mxu0 %v179
    %227 = vmatpush.msra.mxu0 %v178
    %228 = vmatpush.msra.mxu0 %v177
    %229 = vmatmul.f32.gmra.mxu0 %v191
    %v230 = vpop.f32.mrf.mxu0
    %v231 = vadd.f32 %v211, %v230
    %232 = vdwg.mxu0
    %v233 = vmul.f32 %v231, 0.5
    %v234 = vtanh.pop %v233
    %v235 = vadd.f32 %v234, 1.0
    %v236 = vmul.f32 %v235, 0.5
    %v237 = vld [vmem:[%s7] sm:$0xff]
    %v238 = vld [vmem:[%s7 + $0x8] sm:$0xff]
    %v239 = vld [vmem:[%s7 + $0x10] sm:$0xff]
    %v240 = vld [vmem:[%s7 + $0x18] sm:$0xff]
    %v241 = vld [vmem:[%s7 + $0x20] sm:$0xff]
    %v242 = vld [vmem:[%s7 + $0x28] sm:$0xff]
    %v243 = vld [vmem:[%s7 + $0x30] sm:$0xff]
    %v244 = vld [vmem:[%s7 + $0x38] sm:$0xff]
    %v245 = vld [vmem:[%s7 + $0x40] sm:$0xff]
    %v246 = vld [vmem:[%s7 + $0x48] sm:$0xff]
    %v247 = vld [vmem:[%s7 + $0x50] sm:$0xff]
    %v248 = vld [vmem:[%s7 + $0x58] sm:$0xff]
    %v249 = vld [vmem:[%s8] sm:$0x1]
    %v251 = vperm.slane %v249, 0
    %vm253 = vcmask 785408
    %v255 = vsel %vm253, %v236, 0
    %257 = vmatpush.msra.mxu0 0.0
    %258 = vmatpush.msra.mxu0 0.0
    %259 = vmatpush.msra.mxu0 0.0
    %260 = vmatpush.msra.mxu0 0.0
    %261 = vmatpush.msra.mxu0 %v248
    %262 = vmatpush.msra.mxu0 %v247
    %263 = vmatpush.msra.mxu0 %v246
    %264 = vmatpush.msra.mxu0 %v245
    %265 = vmatpush.msra.mxu0 %v244
    %266 = vmatpush.msra.mxu0 %v243
    %267 = vmatpush.msra.mxu0 %v242
    %268 = vmatpush.msra.mxu0 %v241
    %269 = vmatpush.msra.mxu0 %v240
    %270 = vmatpush.msra.mxu0 %v239
    %271 = vmatpush.msra.mxu0 %v238
    %272 = vmatpush.msra.mxu0 %v237
    %273 = vmatmul.f32.gmra.mxu0 %v255
    %v274 = vpop.f32.mrf.mxu0
    %v275 = vadd.f32 %v251, %v274
    %276 = vdwg.mxu0
    %vm277 = vcmask 140288
    %278 = vst.msk [vmem:[#allocation5] sm:$0x3] %vm277, %v275
    // Predicated region
    $region42: #{tpu_custom_call.1} parent=1 // pred_check
      _
    $region43: #{tpu_custom_call.1} parent=1 // pred_check_branch
      %280 = sbr.rel (0) target = $region45
    $region44: #{tpu_custom_call.1} parent=1 // pred_region
      %282 = vsyncadd [#allocation4], 0
      %s284 = sshll.u32 [#allocation5], 4
      %s285 = int_to_ptr.vmem [resolvable:$true] %s284
      %s286 = sshll.u32 %s9, 4
      %s287 = int_to_ptr.hbm [resolvable:$true] %s286
      %289 = dma.vmem_to_hbm [thread:$0]  %s285, 32, %s287, [#allocation4]
    $region45: #{tpu_custom_call.1} parent=1 // pred_fallthru
      _
    // Predicated region
    $region46: #{tpu_custom_call.1} parent=1 // pred_check
      _
    $region47: #{tpu_custom_call.1} parent=1 // pred_check_branch
      %291 = sbr.rel (0) target = $region49
    $region48: #{tpu_custom_call.1} parent=1 // pred_region
      %293 = dma.done [#allocation4], 32
    $region49: #{tpu_custom_call.1} parent=1 // pred_fallthru
      _
    %294 = vsyncpa [#allocation3], 1
    %295 = vsyncpa [#allocation4], 1

</llo_original>
